<compile_context>
chip_gen: v5e
topology: v5e:2x2
jax: 0.10.0
libtpu: 0.0.40
codegen_flags: <defaults>
</compile_context>

<pallas_src>
import jax
import jax.numpy as jnp
import numpy as np
from jax.experimental import pallas as pl
from jax.experimental.pallas import tpu as pltpu


def _frame_updater_kernel(h_ref, w1_ref, b1_ref, w2f_ref, b2f_ref, o_ref):
    x = h_ref[...]                                                     # (R, H), compute dtype
    hid = jnp.dot(x, w1_ref[...], preferred_element_type=jnp.float32)  # f32 accumulate
    hid = jnp.maximum(hid + b1_ref[...], 0.0)                          # bias + ReLU in f32
    hid = hid.astype(w2f_ref.dtype)                                    # back to compute dtype for MXU
    frame = jnp.dot(hid, w2f_ref[...], preferred_element_type=jnp.float32) + b2f_ref[...]
    o_ref[...] = frame.astype(o_ref.dtype)                             # (R, 16) row-major 4x4


def _fold_frame_weights(w2, b2):
    """Fold the frame scatter + identity into the second Linear's weights (f32, bit-exact)."""
    A = np.zeros((6, 16), np.float32)
    A[0, 1], A[0, 4] = 1.0, -1.0      # r0 -> +[0,1], -[1,0]
    A[1, 2], A[1, 8] = 1.0, -1.0      # r1 -> +[0,2], -[2,0]
    A[2, 6], A[2, 9] = 1.0, -1.0      # r2 -> +[1,2], -[2,1]
    A[3, 3] = 1.0                     # t0 -> [0,3]
    A[4, 7] = 1.0                     # t1 -> [1,3]
    A[5, 11] = 1.0                    # t2 -> [2,3]
    base = np.zeros((16,), np.float32)
    base[[0, 5, 10, 15]] = 1.0        # identity diagonal + frames[3,3] = 1
    A = jnp.asarray(A)
    base = jnp.asarray(base)
    w2f = w2.astype(jnp.float32) @ A                 # (H, 16); exact (A is a +/-1 selection)
    b2f = b2.astype(jnp.float32) @ A + base          # (16,)
    return w2f, b2f


def _round_up(x, m):
    return ((x + m - 1) // m) * m


def _choose_rows_per_step(N, H, max_rows, compute_bytes, out_bytes,
                          vmem_budget=12 * 1024 * 1024):
    """Rows per grid step: multiple of 8, >=2 blocks when there is work, VMEM-bounded."""
    R = min(max_rows, _round_up(N, 8))
    # v7x has 2 TensorCores: make sure the "parallel" axis has >= 2 blocks.
    if pl.cdiv(N, R) == 1 and N >= 16:
        R = max(8, _round_up((N + 1) // 2, 8))

    def footprint(r):
        return (2 * r * H * compute_bytes        # h blocks (double-buffered)
                + H * H * compute_bytes          # W1 (single-buffered)
                + H * 16 * compute_bytes         # W2 @ A
                + r * H * 4                      # hid intermediate (f32)
                + 2 * r * 16 * out_bytes         # output blocks
                + 4 * (H + 16))                  # biases (f32)

    while R > 64 and footprint(R) > vmem_budget:
        R = max(64, _round_up(R // 2, 8))
    return R


def frame_updater(h, frames, params, *, max_rows_per_step=512,
                  compute_dtype=jnp.bfloat16):
    """Pallas implementation of FrameUpdater.forward(h, frames).

    params = (w1, b1, w2, b2) with weights stored as (in_features, out_features),
    i.e. pre-transposed relative to torch.nn.Linear.  `frames` is unused by the
    reference forward pass; kept for signature parity.  compute_dtype=None runs
    the matmuls in h.dtype (exactness check); default bf16 is the fast path.
    """
    del frames
    B, S, H = h.shape
    orig_dtype = h.dtype
    w1, b1, w2, b2 = params           # w1: (H, H), b1: (H,), w2: (H, 6), b2: (6,)
    w2f, b2f = _fold_frame_weights(w2, b2)

    cdt = orig_dtype if compute_dtype is None else compute_dtype
    cbytes = jnp.dtype(cdt).itemsize
    obytes = jnp.dtype(orig_dtype).itemsize

    N = B * S
    R = _choose_rows_per_step(N, H, max_rows_per_step, cbytes, obytes)
    n_blocks = pl.cdiv(N, R)          # ragged tail handled by Pallas edge-block clipping

    h2 = h.reshape(N, H)
    if h2.dtype != cdt:
        h2 = h2.astype(cdt)
    w1c = w1.astype(cdt)
    w2fc = w2f.astype(cdt)
    b1r = b1.astype(jnp.float32).reshape(1, H)
    b2fr = b2f.reshape(1, 16)

    cost = pl.CostEstimate(
        flops=2 * N * H * (H + 16),
        transcendentals=0,
        bytes_accessed=(N * H * cbytes + H * H * cbytes + H * 16 * cbytes
                        + 4 * (H + 16) + N * 16 * obytes),
    )

    def call(single_buffer_weights):
        wkw = {"pipeline_mode": pl.Buffered(1)} if single_buffer_weights else {}
        in_specs = [
            pl.BlockSpec((R, H), lambda i: (i, 0)),            # h rows (pipelined)
            pl.BlockSpec((H, H), lambda i: (0, 0), **wkw),     # W1 (grid-invariant)
            pl.BlockSpec((1, H), lambda i: (0, 0), **wkw),     # b1
            pl.BlockSpec((H, 16), lambda i: (0, 0), **wkw),    # W2 @ A (folded)
            pl.BlockSpec((1, 16), lambda i: (0, 0), **wkw),    # b2 @ A + identity base
        ]
        return pl.pallas_call(
            _frame_updater_kernel,
            out_shape=jax.ShapeDtypeStruct((N, 16), orig_dtype),
            grid=(n_blocks,),
            in_specs=in_specs,
            out_specs=pl.BlockSpec((R, 16), lambda i: (i, 0)),
            compiler_params=pltpu.CompilerParams(
                dimension_semantics=("parallel",)),
            cost_estimate=cost,
        )(h2, w1c, b1r, w2fc, b2fr)

    try:
        out = call(True)
    except Exception:
        # This jax build rejects pipeline_mode=Buffered(1); fall back to the
        # default double-buffering for the grid-invariant operands.
        out = call(False)

    frames_update = out.reshape(B, S, 4, 4)
    trans_params = frames_update[..., :3, 3]          # identical to fp[..., 3:]
    return frames_update, trans_params


def ref_frame_updater(h, params):
    """Pure-JAX f32 reference mirroring the PyTorch forward exactly."""
    w1, b1, w2, b2 = params
    fp = jnp.maximum(h @ w1 + b1, 0.0) @ w2 + b2       # (B, S, 6)
    rot_params = fp[..., :3]
    trans_params = fp[..., 3:]
    B, S, _ = h.shape
    r0, r1, r2 = rot_params[..., 0], rot_params[..., 1], rot_params[..., 2]
    zeros = jnp.zeros_like(r0)
    rot = jnp.stack(
        [jnp.stack([zeros, r0, r1], axis=-1),
         jnp.stack([-r0, zeros, r2], axis=-1),
         jnp.stack([-r1, -r2, zeros], axis=-1)], axis=-2) + jnp.eye(3, dtype=h.dtype)
    frames = jnp.zeros((B, S, 4, 4), dtype=h.dtype)
    frames = frames.at[..., :3, :3].set(rot)
    frames = frames.at[..., :3, 3].set(trans_params)
    frames = frames.at[..., 3, 3].set(1.0)
    return frames, trans_params


if __name__ == "__main__":
    B, S, H = 2, 8, 32

    key = jax.random.PRNGKey(0)
    ks = jax.random.split(key, 6)
    h = jax.random.normal(ks[0], (B, S, H), dtype=jnp.float32)
    frames_in = jax.random.normal(ks[1], (B, S, 4, 4), dtype=jnp.float32)  # unused by forward

    def init_linear(kw, kb, d_in, d_out):
        bound = 1.0 / np.sqrt(d_in)
        w = jax.random.uniform(kw, (d_in, d_out), jnp.float32, -bound, bound)  # (in, out)
        b = jax.random.uniform(kb, (d_out,), jnp.float32, -bound, bound)
        return w, b

    w1, b1 = init_linear(ks[2], ks[3], H, H)
    w2, b2 = init_linear(ks[4], ks[5], H, 6)
    params = (w1, b1, w2, b2)

    ref_frames, ref_trans = ref_frame_updater(h, params)

    # 1) f32 compute path: checks the scatter/identity fold is bit-exact.
    fu32, tp32 = frame_updater(h, frames_in, params, compute_dtype=None)
    fu32 = jax.block_until_ready(fu32)
    tp32 = jax.block_until_ready(tp32)
    np.testing.assert_allclose(np.asarray(fu32), np.asarray(ref_frames), rtol=1e-5, atol=1e-5)
    np.testing.assert_allclose(np.asarray(tp32), np.asarray(ref_trans), rtol=1e-5, atol=1e-5)

    # 2) Default bf16-MXU path (f32 accumulation / bias / ReLU): looser tolerance.
    frames_update, trans_params = frame_updater(h, frames_in, params)
    frames_update = jax.block_until_ready(frames_update)
    trans_params = jax.block_until_ready(trans_params)
    assert frames_update.shape == (B, S, 4, 4)
    assert trans_params.shape == (B, S, 3)
    np.testing.assert_allclose(np.asarray(frames_update), np.asarray(ref_frames),
                               rtol=3e-2, atol=3e-2)
    np.testing.assert_allclose(np.asarray(trans_params), np.asarray(ref_trans),
                               rtol=3e-2, atol=3e-2)

    print("KERNEL_OK")
</pallas_src>

<mosaic_0001>
module attributes {stable_mosaic.version = 11 : i64} {
  func.func @_frame_updater_kernel(%arg0: i32, %arg1: memref<8x32xf32, #tpu.memory_space<vmem>>, %arg2: memref<32x32xf32, #tpu.memory_space<vmem>>, %arg3: memref<1x32xf32, #tpu.memory_space<vmem>>, %arg4: memref<32x16xf32, #tpu.memory_space<vmem>>, %arg5: memref<1x16xf32, #tpu.memory_space<vmem>>, %arg6: memref<8x16xf32, #tpu.memory_space<vmem>>) attributes {dimension_semantics = [#tpu.dimension_semantics<parallel>], iteration_bounds = array<i64: 2>, scalar_prefetch = 0 : i64, scratch_operands = 0 : i64, tpu.core_type = #tpu.core_type<tc>, window_params = [{transform_indices = @transform_0, window_bounds = array<i64: 8, 32>}, {pipeline_mode = #tpu.pipeline_mode<synchronous>, transform_indices = @transform_1, window_bounds = array<i64: 32, 32>}, {pipeline_mode = #tpu.pipeline_mode<synchronous>, transform_indices = @transform_2, window_bounds = array<i64: 1, 32>}, {pipeline_mode = #tpu.pipeline_mode<synchronous>, transform_indices = @transform_3, window_bounds = array<i64: 32, 16>}, {pipeline_mode = #tpu.pipeline_mode<synchronous>, transform_indices = @transform_4, window_bounds = array<i64: 1, 16>}, {transform_indices = @transform_5, window_bounds = array<i64: 8, 16>}]} {
    %c0 = arith.constant 0 : index
    %c0_0 = arith.constant 0 : index
    %0 = vector.load %arg1[%c0, %c0_0] : memref<8x32xf32, #tpu.memory_space<vmem>>, vector<8x32xf32>
    %c0_1 = arith.constant 0 : index
    %c0_2 = arith.constant 0 : index
    %1 = vector.load %arg2[%c0_1, %c0_2] : memref<32x32xf32, #tpu.memory_space<vmem>>, vector<32x32xf32>
    %cst = arith.constant dense<0.000000e+00> : vector<8x32xf32>
    %2 = tpu.matmul %0, %1, %cst {dimension_numbers = #tpu.dot_dimension_numbers<[1], [0], [0], [1], [0, 0, 1, 1], [], []>} : vector<8x32xf32>, vector<32x32xf32>, vector<8x32xf32> -> vector<8x32xf32>
    %c0_3 = arith.constant 0 : index
    %c0_4 = arith.constant 0 : index
    %3 = vector.load %arg3[%c0_3, %c0_4] : memref<1x32xf32, #tpu.memory_space<vmem>>, vector<1x32xf32>
    %4 = vector.broadcast %3 : vector<1x32xf32> to vector<8x32xf32>
    %5 = arith.addf %2, %4 : vector<8x32xf32>
    %cst_5 = arith.constant 0.000000e+00 : f32
    %6 = vector.broadcast %cst_5 : f32 to vector<8x32xf32>
    %7 = arith.maximumf %5, %6 : vector<8x32xf32>
    %c0_6 = arith.constant 0 : index
    %c0_7 = arith.constant 0 : index
    %8 = vector.load %arg4[%c0_6, %c0_7] : memref<32x16xf32, #tpu.memory_space<vmem>>, vector<32x16xf32>
    %cst_8 = arith.constant dense<0.000000e+00> : vector<8x16xf32>
    %9 = tpu.matmul %7, %8, %cst_8 {dimension_numbers = #tpu.dot_dimension_numbers<[1], [0], [0], [1], [0, 0, 1, 1], [], []>} : vector<8x32xf32>, vector<32x16xf32>, vector<8x16xf32> -> vector<8x16xf32>
    %c0_9 = arith.constant 0 : index
    %c0_10 = arith.constant 0 : index
    %10 = vector.load %arg5[%c0_9, %c0_10] : memref<1x16xf32, #tpu.memory_space<vmem>>, vector<1x16xf32>
    %11 = vector.broadcast %10 : vector<1x16xf32> to vector<8x16xf32>
    %12 = arith.addf %9, %11 : vector<8x16xf32>
    %c0_11 = arith.constant 0 : index
    %c0_12 = arith.constant 0 : index
    %13 = vector.load %arg6[%c0_11, %c0_12] : memref<8x16xf32, #tpu.memory_space<vmem>>, vector<8x16xf32>
    tpu.vector_store %arg6[%c0_11, %c0_12], %12 {strides = array<i32>} : memref<8x16xf32, #tpu.memory_space<vmem>>, vector<8x16xf32>,
    return
  }
  func.func @transform_0(%arg0: i32) -> (i32, i32) {
    %c0_i32 = arith.constant 0 : i32
    %c0_i32_0 = arith.constant 0 : i32
    return %arg0, %c0_i32 : i32, i32
  }
  func.func @transform_1(%arg0: i32) -> (i32, i32) {
    %c0_i32 = arith.constant 0 : i32
    %c0_i32_0 = arith.constant 0 : i32
    %c0_i32_1 = arith.constant 0 : i32
    return %c0_i32, %c0_i32_0 : i32, i32
  }
  func.func @transform_2(%arg0: i32) -> (i32, i32) {
    %c0_i32 = arith.constant 0 : i32
    %c0_i32_0 = arith.constant 0 : i32
    %c0_i32_1 = arith.constant 0 : i32
    return %c0_i32, %c0_i32_0 : i32, i32
  }
  func.func @transform_3(%arg0: i32) -> (i32, i32) {
    %c0_i32 = arith.constant 0 : i32
    %c0_i32_0 = arith.constant 0 : i32
    %c0_i32_1 = arith.constant 0 : i32
    return %c0_i32, %c0_i32_0 : i32, i32
  }
  func.func @transform_4(%arg0: i32) -> (i32, i32) {
    %c0_i32 = arith.constant 0 : i32
    %c0_i32_0 = arith.constant 0 : i32
    %c0_i32_1 = arith.constant 0 : i32
    return %c0_i32, %c0_i32_0 : i32, i32
  }
  func.func @transform_5(%arg0: i32) -> (i32, i32) {
    %c0_i32 = arith.constant 0 : i32
    %c0_i32_0 = arith.constant 0 : i32
    return %arg0, %c0_i32 : i32, i32
  }
}

module attributes {stable_mosaic.version = 11 : i64} {
  func.func @_frame_updater_kernel(%arg0: i32, %arg1: memref<8x32xf32, #tpu.memory_space<vmem>>, %arg2: memref<32x32xf32, #tpu.memory_space<vmem>>, %arg3: memref<1x32xf32, #tpu.memory_space<vmem>>, %arg4: memref<32x16xf32, #tpu.memory_space<vmem>>, %arg5: memref<1x16xf32, #tpu.memory_space<vmem>>, %arg6: memref<8x16xf32, #tpu.memory_space<vmem>>) attributes {dimension_semantics = [#tpu.dimension_semantics<parallel>], iteration_bounds = array<i64: 2>, scalar_prefetch = 0 : i64, scratch_operands = 0 : i64, tpu.core_type = #tpu.core_type<tc>, window_params = [{transform_indices = @transform_0, window_bounds = array<i64: 8, 32>}, {pipeline_mode = #tpu.pipeline_mode<synchronous>, transform_indices = @transform_1, window_bounds = array<i64: 32, 32>}, {pipeline_mode = #tpu.pipeline_mode<synchronous>, transform_indices = @transform_2, window_bounds = array<i64: 1, 32>}, {pipeline_mode = #tpu.pipeline_mode<synchronous>, transform_indices = @transform_3, window_bounds = array<i64: 32, 16>}, {pipeline_mode = #tpu.pipeline_mode<synchronous>, transform_indices = @transform_4, window_bounds = array<i64: 1, 16>}, {transform_indices = @transform_5, window_bounds = array<i64: 8, 16>}]} {
    %c0 = arith.constant 0 : index
    %c0_0 = arith.constant 0 : index
    %0 = vector.load %arg1[%c0, %c0_0] : memref<8x32xf32, #tpu.memory_space<vmem>>, vector<8x32xf32>
    %c0_1 = arith.constant 0 : index
    %c0_2 = arith.constant 0 : index
    %1 = vector.load %arg2[%c0_1, %c0_2] : memref<32x32xf32, #tpu.memory_space<vmem>>, vector<32x32xf32>
    %cst = arith.constant dense<0.000000e+00> : vector<8x32xf32>
    %2 = tpu.matmul %0, %1, %cst {dimension_numbers = #tpu.dot_dimension_numbers<[1], [0], [0], [1], [0, 0, 1, 1], [], []>} : vector<8x32xf32>, vector<32x32xf32>, vector<8x32xf32> -> vector<8x32xf32>
    %c0_3 = arith.constant 0 : index
    %c0_4 = arith.constant 0 : index
    %3 = vector.load %arg3[%c0_3, %c0_4] : memref<1x32xf32, #tpu.memory_space<vmem>>, vector<1x32xf32>
    %4 = vector.broadcast %3 : vector<1x32xf32> to vector<8x32xf32>
    %5 = arith.addf %2, %4 : vector<8x32xf32>
    %cst_5 = arith.constant 0.000000e+00 : f32
    %6 = vector.broadcast %cst_5 : f32 to vector<8x32xf32>
    %7 = arith.maximumf %5, %6 : vector<8x32xf32>
    %c0_6 = arith.constant 0 : index
    %c0_7 = arith.constant 0 : index
    %8 = vector.load %arg4[%c0_6, %c0_7] : memref<32x16xf32, #tpu.memory_space<vmem>>, vector<32x16xf32>
    %cst_8 = arith.constant dense<0.000000e+00> : vector<8x16xf32>
    %9 = tpu.matmul %7, %8, %cst_8 {dimension_numbers = #tpu.dot_dimension_numbers<[1], [0], [0], [1], [0, 0, 1, 1], [], []>} : vector<8x32xf32>, vector<32x16xf32>, vector<8x16xf32> -> vector<8x16xf32>
    %c0_9 = arith.constant 0 : index
    %c0_10 = arith.constant 0 : index
    %10 = vector.load %arg5[%c0_9, %c0_10] : memref<1x16xf32, #tpu.memory_space<vmem>>, vector<1x16xf32>
    %11 = vector.broadcast %10 : vector<1x16xf32> to vector<8x16xf32>
    %12 = arith.addf %9, %11 : vector<8x16xf32>
    %c0_11 = arith.constant 0 : index
    %c0_12 = arith.constant 0 : index
    %13 = vector.load %arg6[%c0_11, %c0_12] : memref<8x16xf32, #tpu.memory_space<vmem>>, vector<8x16xf32>
    tpu.vector_store %arg6[%c0_11, %c0_12], %12 {strides = array<i32>} : memref<8x16xf32, #tpu.memory_space<vmem>>, vector<8x16xf32>,
    return
  }
  func.func @transform_0(%arg0: i32) -> (i32, i32) {
    %c0_i32 = arith.constant 0 : i32
    %c0_i32_0 = arith.constant 0 : i32
    return %arg0, %c0_i32 : i32, i32
  }
  func.func @transform_1(%arg0: i32) -> (i32, i32) {
    %c0_i32 = arith.constant 0 : i32
    %c0_i32_0 = arith.constant 0 : i32
    %c0_i32_1 = arith.constant 0 : i32
    return %c0_i32, %c0_i32_0 : i32, i32
  }
  func.func @transform_2(%arg0: i32) -> (i32, i32) {
    %c0_i32 = arith.constant 0 : i32
    %c0_i32_0 = arith.constant 0 : i32
    %c0_i32_1 = arith.constant 0 : i32
    return %c0_i32, %c0_i32_0 : i32, i32
  }
  func.func @transform_3(%arg0: i32) -> (i32, i32) {
    %c0_i32 = arith.constant 0 : i32
    %c0_i32_0 = arith.constant 0 : i32
    %c0_i32_1 = arith.constant 0 : i32
    return %c0_i32, %c0_i32_0 : i32, i32
  }
  func.func @transform_4(%arg0: i32) -> (i32, i32) {
    %c0_i32 = arith.constant 0 : i32
    %c0_i32_0 = arith.constant 0 : i32
    %c0_i32_1 = arith.constant 0 : i32
    return %c0_i32, %c0_i32_0 : i32, i32
  }
  func.func @transform_5(%arg0: i32) -> (i32, i32) {
    %c0_i32 = arith.constant 0 : i32
    %c0_i32_0 = arith.constant 0 : i32
    return %arg0, %c0_i32 : i32, i32
  }
}

</mosaic_0001>

<llo_original>
// kernel: tpu_custom_call.1
$region0: #{tpu_custom_call.1}
  #allocation0 [shape = 'u32[]', space=smem, size = 0x4, offset = 0x4, fixed_abs, tag = 'smem constant byte address 0x4 - core index']
  #allocation1 [shape = 'u32[72,128]{1,0:T(1,128)}', space=vmem, size = 0x9000, scoped, tag = 'internal scratch']
  %s0 = inlined_call_operand.vmem [shape: f32[16,32], index: 0, kind: input, shape index: {}]
  %s1 = inlined_call_operand.vmem [shape: f32[32,32], index: 1, kind: input, shape index: {}]
  %s2 = inlined_call_operand.vmem [shape: f32[1,32], index: 2, kind: input, shape index: {}]
  %s3 = inlined_call_operand.vmem [shape: f32[32,16], index: 3, kind: input, shape index: {}]
  %s4 = inlined_call_operand.vmem [shape: f32[1,16], index: 4, kind: input, shape index: {}]
  %s5 = inlined_call_operand.hbm [shape: f32[16,16], index: 5, kind: output, shape index: {}]
  %s6 = sld [smem:[#allocation0]]
  $region53: #{tpu_custom_call.1} parent=0
    _
  %s8 = ssub.s32 1, %s6
  %s9 = scalar_select 0, %s8, %s6
  $region1: #{tpu_custom_call.1} parent=0
    #allocation2 [shape = 'u8[8192]{0}', space=vmem, size = 0x2000, scoped, tag = 'output window, operand 0']
    #allocation3 [shape = 's32[2]{0}', space=sflag, size = 0x8, scoped, tag = 'scoped memory for tpu_custom_call.1']
    %10 = vsyncpa [#allocation3], 0
    %s11 = scalar_lea.sflag [#allocation3], 1
    %12 = vsyncpa %s11, 0
    loop: start=0, step=1, limit=4
    $region2: #{tpu_custom_call.1} parent=1 // loop_pre_header
      _
    $region3: #{tpu_custom_call.1} parent=1 // loop_header
      %s14 = sphi 0, %s18
      %p15 = scmp.ge.s32.totalorder %s14, 4
      %s24 = sphi 0, %s26
      %s27 = sphi 0, %s24
      %s28 = sphi 0, %s27
      %s44 = sphi 0, %s28
      %s48 = sphi 0, %s48
      %s50 = sphi 0, %s48
      %s51 = sphi 0, %s50
      %s65 = sphi 0, %s51
      %s69 = sphi 0, %s69
      %s71 = sphi 0, %s69
      %s72 = sphi 0, %s71
      %s86 = sphi 0, %s72
      %s90 = sphi 0, %s90
      %s92 = sphi 0, %s90
      %s93 = sphi 0, %s92
      %s107 = sphi 0, %s93
      %s111 = sphi 0, %s111
      %s113 = sphi 0, %s111
      %s114 = sphi 0, %s113
      %s128 = sphi 0, %s114
      %s134 = sphi 0, %s136
      %s137 = sphi 0, %s134
      %s138 = sphi 0, %s137
      %s154 = sphi 0, %s138
    $region4: #{tpu_custom_call.1} parent=1 // loop_header_branch
      %17 = sbr.rel (%p15) target = $region8
    $region5: #{tpu_custom_call.1} parent=1 // loop_body
      %s19 = ssub.s32 %s14, 1
      %s20 = ssub.s32 %s14, 2
      %s21 = sadd.s32 %s14, 1
      %s22 = ssub.s32 %s14, %s21
      %p23 = scmp.eq.s32.totalorder %s22, 0
      %s25 = sadd.s32 %s24, 1
      %s26 = scalar_select %p23, %s24, %s25
      %p29 = pneg %p23
      %p30 = scmp.eq.s32.totalorder %s14, 1
      %p31 = por %p29, %p30
      %p32 = scmp.ne.s32.totalorder %s24, %s27
      %p33 = scmp.eq.s32.totalorder %s14, 0
      %p34 = por %p32, %p33
      %p35 = scmp.ne.s32.totalorder %s24, %s27
      %p36 = scmp.eq.s32.totalorder %s19, 1
      %p37 = por %p35, %p36
      %p38 = scmp.ne.s32.totalorder %s27, %s28
      %p39 = scmp.eq.s32.totalorder %s19, 0
      %p40 = por %p38, %p39
      %p41 = scmp.ne.s32.totalorder %s27, %s28
      %p42 = scmp.eq.s32.totalorder %s20, 1
      %p43 = por %p41, %p42
      %p45 = scmp.ne.s32.totalorder %s28, %s44
      %p46 = scmp.eq.s32.totalorder %s20, 0
      %p47 = por %p45, %p46
      %s49 = sadd.s32 %s48, 1
      %p52 = scmp.eq.s32.totalorder %s14, 1
      %p53 = scmp.ne.s32.totalorder %s48, %s50
      %p54 = scmp.eq.s32.totalorder %s14, 0
      %p55 = por %p53, %p54
      %p56 = scmp.ne.s32.totalorder %s48, %s50
      %p57 = scmp.eq.s32.totalorder %s19, 1
      %p58 = por %p56, %p57
      %p59 = scmp.ne.s32.totalorder %s50, %s51
      %p60 = scmp.eq.s32.totalorder %s19, 0
      %p61 = por %p59, %p60
      %p62 = scmp.ne.s32.totalorder %s50, %s51
      %p63 = scmp.eq.s32.totalorder %s20, 1
      %p64 = por %p62, %p63
      %p66 = scmp.ne.s32.totalorder %s51, %s65
      %p67 = scmp.eq.s32.totalorder %s20, 0
      %p68 = por %p66, %p67
      %s70 = sadd.s32 %s69, 1
      %p73 = scmp.eq.s32.totalorder %s14, 1
      %p74 = scmp.ne.s32.totalorder %s69, %s71
      %p75 = scmp.eq.s32.totalorder %s14, 0
      %p76 = por %p74, %p75
      %p77 = scmp.ne.s32.totalorder %s69, %s71
      %p78 = scmp.eq.s32.totalorder %s19, 1
      %p79 = por %p77, %p78
      %p80 = scmp.ne.s32.totalorder %s71, %s72
      %p81 = scmp.eq.s32.totalorder %s19, 0
      %p82 = por %p80, %p81
      %p83 = scmp.ne.s32.totalorder %s71, %s72
      %p84 = scmp.eq.s32.totalorder %s20, 1
      %p85 = por %p83, %p84
      %p87 = scmp.ne.s32.totalorder %s72, %s86
      %p88 = scmp.eq.s32.totalorder %s20, 0
      %p89 = por %p87, %p88
      %s91 = sadd.s32 %s90, 1
      %p94 = scmp.eq.s32.totalorder %s14, 1
      %p95 = scmp.ne.s32.totalorder %s90, %s92
      %p96 = scmp.eq.s32.totalorder %s14, 0
      %p97 = por %p95, %p96
      %p98 = scmp.ne.s32.totalorder %s90, %s92
      %p99 = scmp.eq.s32.totalorder %s19, 1
      %p100 = por %p98, %p99
      %p101 = scmp.ne.s32.totalorder %s92, %s93
      %p102 = scmp.eq.s32.totalorder %s19, 0
      %p103 = por %p101, %p102
      %p104 = scmp.ne.s32.totalorder %s92, %s93
      %p105 = scmp.eq.s32.totalorder %s20, 1
      %p106 = por %p104, %p105
      %p108 = scmp.ne.s32.totalorder %s93, %s107
      %p109 = scmp.eq.s32.totalorder %s20, 0
      %p110 = por %p108, %p109
      %s112 = sadd.s32 %s111, 1
      %p115 = scmp.eq.s32.totalorder %s14, 1
      %p116 = scmp.ne.s32.totalorder %s111, %s113
      %p117 = scmp.eq.s32.totalorder %s14, 0
      %p118 = por %p116, %p117
      %p119 = scmp.ne.s32.totalorder %s111, %s113
      %p120 = scmp.eq.s32.totalorder %s19, 1
      %p121 = por %p119, %p120
      %p122 = scmp.ne.s32.totalorder %s113, %s114
      %p123 = scmp.eq.s32.totalorder %s19, 0
      %p124 = por %p122, %p123
      %p125 = scmp.ne.s32.totalorder %s113, %s114
      %p126 = scmp.eq.s32.totalorder %s20, 1
      %p127 = por %p125, %p126
      %p129 = scmp.ne.s32.totalorder %s114, %s128
      %p130 = scmp.eq.s32.totalorder %s20, 0
      %p131 = por %p129, %p130
      %s132 = ssub.s32 %s14, %s21
      %p133 = scmp.eq.s32.totalorder %s132, 0
      %s135 = sadd.s32 %s134, 1
      %s136 = scalar_select %p133, %s134, %s135
      %p139 = pneg %p133
      %p140 = scmp.eq.s32.totalorder %s14, 1
      %p141 = por %p139, %p140
      %p142 = scmp.ne.s32.totalorder %s134, %s137
      %p143 = scmp.eq.s32.totalorder %s14, 0
      %p144 = por %p142, %p143
      %p145 = scmp.ne.s32.totalorder %s134, %s137
      %p146 = scmp.eq.s32.totalorder %s19, 1
      %p147 = por %p145, %p146
      %p148 = scmp.ne.s32.totalorder %s137, %s138
      %p149 = scmp.eq.s32.totalorder %s19, 0
      %p150 = por %p148, %p149
      %p151 = scmp.ne.s32.totalorder %s137, %s138
      %p152 = scmp.eq.s32.totalorder %s20, 1
      %p153 = por %p151, %p152
      %p155 = scmp.ne.s32.totalorder %s138, %s154
      %p156 = scmp.eq.s32.totalorder %s20, 0
      %p157 = por %p155, %p156
      %p158 = scmp.le.s32.totalorder 1, %s14
      %p159 = scmp.lt.s32.totalorder %s14, 3
      %p160 = pnand %p158, %p159
      %p161 = pneg %p160
      // Predicated region
      $region9: #{tpu_custom_call.1} parent=5 // pred_check
        _
      $region10: #{tpu_custom_call.1} parent=5 // pred_check_branch
        %163 = sbr.rel (%p160) target = $region12
      $region11: #{tpu_custom_call.1} parent=5 // pred_region
        %s164 = ssub.s32 %s14, 1
        // Predicated region
        $region13: #{tpu_custom_call.1} parent=11 // pred_check
          %p165 = pneg %p61
        $region14: #{tpu_custom_call.1} parent=11 // pred_check_branch
          %167 = sbr.rel (%p165) target = $region16
        $region15: #{tpu_custom_call.1} parent=11 // pred_region
          _
        $region16: #{tpu_custom_call.1} parent=11 // pred_fallthru
          _
        // Predicated region
        $region17: #{tpu_custom_call.1} parent=11 // pred_check
          %p168 = pneg %p82
        $region18: #{tpu_custom_call.1} parent=11 // pred_check_branch
          %170 = sbr.rel (%p168) target = $region20
        $region19: #{tpu_custom_call.1} parent=11 // pred_region
          _
        $region20: #{tpu_custom_call.1} parent=11 // pred_fallthru
          _
        // Predicated region
        $region21: #{tpu_custom_call.1} parent=11 // pred_check
          %p171 = pneg %p103
        $region22: #{tpu_custom_call.1} parent=11 // pred_check_branch
          %173 = sbr.rel (%p171) target = $region24
        $region23: #{tpu_custom_call.1} parent=11 // pred_region
          _
        $region24: #{tpu_custom_call.1} parent=11 // pred_fallthru
          _
        // Predicated region
        $region25: #{tpu_custom_call.1} parent=11 // pred_check
          %p174 = pneg %p124
        $region26: #{tpu_custom_call.1} parent=11 // pred_check_branch
          %176 = sbr.rel (%p174) target = $region28
        $region27: #{tpu_custom_call.1} parent=11 // pred_region
          _
        $region28: #{tpu_custom_call.1} parent=11 // pred_fallthru
          _
      $region12: #{tpu_custom_call.1} parent=5 // pred_fallthru
        _
      %p177 = scmp.lt.s32.totalorder %s14, 2
      // Predicated region
      $region29: #{tpu_custom_call.1} parent=5 // pred_check
        %p178 = pneg %p177
      $region30: #{tpu_custom_call.1} parent=5 // pred_check_branch
        %180 = sbr.rel (%p178) target = $region32
      $region31: #{tpu_custom_call.1} parent=5 // pred_region
        // Predicated region
        $region33: #{tpu_custom_call.1} parent=31 // pred_check
          %p181 = pneg %p34
        $region34: #{tpu_custom_call.1} parent=31 // pred_check_branch
          %183 = sbr.rel (%p181) target = $region36
        $region35: #{tpu_custom_call.1} parent=31 // pred_region
          %p184 = scmp.lt.s32.totalorder %s14, 1
          %s185 = scalar_select %p184, %s14, 1
          %s186 = smul.addr %s185, 8
          %s187 = scalar_lea.vmem %s0, %s186
        $region36: #{tpu_custom_call.1} parent=31 // pred_fallthru
          _
      $region32: #{tpu_custom_call.1} parent=5 // pred_fallthru
        _
      %p188 = scmp.le.s32.totalorder 1, %s14
      %p189 = scmp.lt.s32.totalorder %s14, 3
      %p190 = pnand %p188, %p189
      %p191 = pneg %p190
      // Predicated region
      $region37: #{tpu_custom_call.1} parent=5 // pred_check
        _
      $region38: #{tpu_custom_call.1} parent=5 // pred_check_branch
        %193 = sbr.rel (%p190) target = $region40
      $region39: #{tpu_custom_call.1} parent=5 // pred_region
        %s194 = ssub.s32 %s14, 1
        %p195 = scmp.lt.s32.totalorder %s19, 1
        %s196 = scalar_select %p195, %s19, 1
        %s197 = smul.addr %s196, 8
        %s198 = scalar_lea.vmem %s0, %s197
        %p199 = pneg %p40
        %p200 = pneg %p37
        %p201 = pneg %p61
        %p202 = pneg %p58
        %p203 = pneg %p82
        %p204 = pneg %p79
        %p205 = pneg %p103
        %p206 = pneg %p100
        %p207 = pneg %p124
        %p208 = pneg %p121
        %p209 = pneg %p150
        %p210 = pneg %p147
        %s211 = sand.u32 %s137, 1
        %s212 = scalar_lea.sflag [#allocation3], %s211
        %s213 = sand.u32 %s137, 1
        %s214 = smul.addr %s213, 8
        %s215 = scalar_lea.vmem [#allocation2], %s214
        %p216 = scmp.lt.s32.totalorder %s19, 1
        %s217 = scalar_select %p216, %s19, 1
        %s218 = smul.addr %s217, 8
        %s219 = scalar_lea.vmem %s0, %s218
        %v220 = vld [vmem:[%s219] sm:$0xff]
        %v221 = vld [vmem:[%s1] sm:$0xff]
        %v222 = vld [vmem:[%s1 + $0x8] sm:$0xff]
        %v223 = vld [vmem:[%s1 + $0x10] sm:$0xff]
        %v224 = vld [vmem:[%s1 + $0x18] sm:$0xff]
        %v225 = vld [vmem:[%s2] sm:$0x1]
        %v227 = vperm.slane %v225, 0
        %vm229 = vcmask 261120
        %v231 = vsel %vm229, %v220, 0
        %233 = vmatpush.msra.mxu0 0.0
        %234 = vmatpush.msra.mxu0 0.0
        %235 = vmatpush.msra.mxu0 0.0
        %236 = vmatpush.msra.mxu0 0.0
        %237 = vmatpush.msra.mxu0 0.0
        %238 = vmatpush.msra.mxu0 0.0
        %239 = vmatpush.msra.mxu0 0.0
        %240 = vmatpush.msra.mxu0 0.0
        %241 = vmatpush.msra.mxu0 0.0
        %242 = vmatpush.msra.mxu0 0.0
        %243 = vmatpush.msra.mxu0 0.0
        %244 = vmatpush.msra.mxu0 0.0
        %245 = vmatpush.msra.mxu0 %v224
        %246 = vmatpush.msra.mxu0 %v223
        %247 = vmatpush.msra.mxu0 %v222
        %248 = vmatpush.msra.mxu0 %v221
        %249 = vmatmul.f32.gmra.mxu0 %v231
        %v250 = vpop.f32.mrf.mxu0
        %v251 = vadd.f32 %v227, %v250
        %252 = vdwg.mxu0
        %v253 = vmax.f32 %v251, 0.0
        %v254 = vld [vmem:[%s3] sm:$0xff]
        %v255 = vld [vmem:[%s3 + $0x8] sm:$0xff]
        %v256 = vld [vmem:[%s3 + $0x10] sm:$0xff]
        %v257 = vld [vmem:[%s3 + $0x18] sm:$0xff]
        %v258 = vld [vmem:[%s4] sm:$0x1]
        %v260 = vperm.slane %v258, 0
        %v263 = vsel %vm229, %v253, 0
        %265 = vmatpush.msra.mxu0 0.0
        %266 = vmatpush.msra.mxu0 0.0
        %267 = vmatpush.msra.mxu0 0.0
        %268 = vmatpush.msra.mxu0 0.0
        %269 = vmatpush.msra.mxu0 0.0
        %270 = vmatpush.msra.mxu0 0.0
        %271 = vmatpush.msra.mxu0 0.0
        %272 = vmatpush.msra.mxu0 0.0
        %273 = vmatpush.msra.mxu0 0.0
        %274 = vmatpush.msra.mxu0 0.0
        %275 = vmatpush.msra.mxu0 0.0
        %276 = vmatpush.msra.mxu0 0.0
        %277 = vmatpush.msra.mxu0 %v257
        %278 = vmatpush.msra.mxu0 %v256
        %279 = vmatpush.msra.mxu0 %v255
        %280 = vmatpush.msra.mxu0 %v254
        %281 = vmatmul.f32.gmra.mxu0 %v263
        %v282 = vpop.f32.mrf.mxu0
        %v283 = vadd.f32 %v260, %v282
        %284 = vdwg.mxu0
        %vm285 = vcmask 130048
        %286 = vst.msk [vmem:[%s215] sm:$0xff] %vm285, %v283
        %s287 = sand.u32 %s137, 1
        %s288 = scalar_lea.sflag [#allocation3], %s287
        %s289 = sand.u32 %s137, 1
        %s290 = smul.addr %s289, 8
        %s291 = scalar_lea.vmem [#allocation2], %s290
        // Predicated region
        $region41: #{tpu_custom_call.1} parent=39 // pred_check
          %p292 = pneg %p147
        $region42: #{tpu_custom_call.1} parent=39 // pred_check_branch
          %294 = sbr.rel (%p292) target = $region44
        $region43: #{tpu_custom_call.1} parent=39 // pred_region
          %296 = vsyncadd %s288, 0
          %s297 = smul.addr %s19, 8
          %s298 = scalar_lea.hbm %s5, %s297
          %s300 = sshll.u32 %s291, 4
          %s301 = int_to_ptr.vmem [resolvable:$true] %s300
          %s302 = sshll.u32 %s298, 4
          %s303 = int_to_ptr.hbm [resolvable:$true] %s302
          %305 = dma.vmem_to_hbm [thread:$0]  %s301, 128, %s303, %s288
        $region44: #{tpu_custom_call.1} parent=39 // pred_fallthru
          _
      $region40: #{tpu_custom_call.1} parent=5 // pred_fallthru
        _
      %p306 = scmp.le.s32.totalorder 2, %s14
      // Predicated region
      $region45: #{tpu_custom_call.1} parent=5 // pred_check
        %p307 = pneg %p306
      $region46: #{tpu_custom_call.1} parent=5 // pred_check_branch
        %309 = sbr.rel (%p307) target = $region48
      $region47: #{tpu_custom_call.1} parent=5 // pred_region
        %s310 = ssub.s32 %s14, 2
        // Predicated region
        $region49: #{tpu_custom_call.1} parent=47 // pred_check
          %p311 = pneg %p153
        $region50: #{tpu_custom_call.1} parent=47 // pred_check_branch
          %313 = sbr.rel (%p311) target = $region52
        $region51: #{tpu_custom_call.1} parent=47 // pred_region
          %s314 = sand.u32 %s138, 1
          %s315 = scalar_lea.sflag [#allocation3], %s314
          %s316 = sand.u32 %s138, 1
          %s317 = smul.addr %s316, 8
          %s318 = scalar_lea.vmem [#allocation2], %s317
          %320 = dma.done %s315, 128
        $region52: #{tpu_custom_call.1} parent=47 // pred_fallthru
          _
      $region48: #{tpu_custom_call.1} parent=5 // pred_fallthru
        _
    $region6: #{tpu_custom_call.1} parent=1 // loop_footer
      %s18 = sadd.s32 1, %s14
    $region7: #{tpu_custom_call.1} parent=1 // loop_footer_branch
      %13 = sbr.rel target = $region3
    $region8: #{tpu_custom_call.1} parent=1 // loop_exit
      _
    %321 = vsyncpa [#allocation3], 1
    %s322 = scalar_lea.sflag [#allocation3], 1
    %323 = vsyncpa %s322, 1

// kernel: tpu_custom_call.1
$region0: #{tpu_custom_call.1}
  #allocation0 [shape = 'u32[]', space=smem, size = 0x4, offset = 0x4, fixed_abs, tag = 'smem constant byte address 0x4 - core index']
  #allocation1 [shape = 'u32[72,128]{1,0:T(1,128)}', space=vmem, size = 0x9000, scoped, tag = 'internal scratch']
  %s0 = inlined_call_operand.vmem [shape: f32[16,32], index: 0, kind: input, shape index: {}]
  %s1 = inlined_call_operand.vmem [shape: f32[32,32], index: 1, kind: input, shape index: {}]
  %s2 = inlined_call_operand.vmem [shape: f32[1,32], index: 2, kind: input, shape index: {}]
  %s3 = inlined_call_operand.vmem [shape: f32[32,16], index: 3, kind: input, shape index: {}]
  %s4 = inlined_call_operand.vmem [shape: f32[1,16], index: 4, kind: input, shape index: {}]
  %s5 = inlined_call_operand.hbm [shape: f32[16,16], index: 5, kind: output, shape index: {}]
  %s6 = sld [smem:[#allocation0]]
  $region53: #{tpu_custom_call.1} parent=0
    _
  %s8 = ssub.s32 1, %s6
  %s9 = scalar_select 0, %s8, %s6
  $region1: #{tpu_custom_call.1} parent=0
    #allocation2 [shape = 'u8[8192]{0}', space=vmem, size = 0x2000, scoped, tag = 'output window, operand 0']
    #allocation3 [shape = 's32[2]{0}', space=sflag, size = 0x8, scoped, tag = 'scoped memory for tpu_custom_call.1']
    %10 = vsyncpa [#allocation3], 0
    %s11 = scalar_lea.sflag [#allocation3], 1
    %12 = vsyncpa %s11, 0
    loop: start=0, step=1, limit=4
    $region2: #{tpu_custom_call.1} parent=1 // loop_pre_header
      _
    $region3: #{tpu_custom_call.1} parent=1 // loop_header
      %s14 = sphi 0, %s18
      %p15 = scmp.ge.s32.totalorder %s14, 4
      %s24 = sphi 0, %s26
      %s27 = sphi 0, %s24
      %s28 = sphi 0, %s27
      %s44 = sphi 0, %s28
      %s48 = sphi 0, %s48
      %s50 = sphi 0, %s48
      %s51 = sphi 0, %s50
      %s65 = sphi 0, %s51
      %s69 = sphi 0, %s69
      %s71 = sphi 0, %s69
      %s72 = sphi 0, %s71
      %s86 = sphi 0, %s72
      %s90 = sphi 0, %s90
      %s92 = sphi 0, %s90
      %s93 = sphi 0, %s92
      %s107 = sphi 0, %s93
      %s111 = sphi 0, %s111
      %s113 = sphi 0, %s111
      %s114 = sphi 0, %s113
      %s128 = sphi 0, %s114
      %s134 = sphi 0, %s136
      %s137 = sphi 0, %s134
      %s138 = sphi 0, %s137
      %s154 = sphi 0, %s138
    $region4: #{tpu_custom_call.1} parent=1 // loop_header_branch
      %17 = sbr.rel (%p15) target = $region8
    $region5: #{tpu_custom_call.1} parent=1 // loop_body
      %s19 = ssub.s32 %s14, 1
      %s20 = ssub.s32 %s14, 2
      %s21 = sadd.s32 %s14, 1
      %s22 = ssub.s32 %s14, %s21
      %p23 = scmp.eq.s32.totalorder %s22, 0
      %s25 = sadd.s32 %s24, 1
      %s26 = scalar_select %p23, %s24, %s25
      %p29 = pneg %p23
      %p30 = scmp.eq.s32.totalorder %s14, 1
      %p31 = por %p29, %p30
      %p32 = scmp.ne.s32.totalorder %s24, %s27
      %p33 = scmp.eq.s32.totalorder %s14, 0
      %p34 = por %p32, %p33
      %p35 = scmp.ne.s32.totalorder %s24, %s27
      %p36 = scmp.eq.s32.totalorder %s19, 1
      %p37 = por %p35, %p36
      %p38 = scmp.ne.s32.totalorder %s27, %s28
      %p39 = scmp.eq.s32.totalorder %s19, 0
      %p40 = por %p38, %p39
      %p41 = scmp.ne.s32.totalorder %s27, %s28
      %p42 = scmp.eq.s32.totalorder %s20, 1
      %p43 = por %p41, %p42
      %p45 = scmp.ne.s32.totalorder %s28, %s44
      %p46 = scmp.eq.s32.totalorder %s20, 0
      %p47 = por %p45, %p46
      %s49 = sadd.s32 %s48, 1
      %p52 = scmp.eq.s32.totalorder %s14, 1
      %p53 = scmp.ne.s32.totalorder %s48, %s50
      %p54 = scmp.eq.s32.totalorder %s14, 0
      %p55 = por %p53, %p54
      %p56 = scmp.ne.s32.totalorder %s48, %s50
      %p57 = scmp.eq.s32.totalorder %s19, 1
      %p58 = por %p56, %p57
      %p59 = scmp.ne.s32.totalorder %s50, %s51
      %p60 = scmp.eq.s32.totalorder %s19, 0
      %p61 = por %p59, %p60
      %p62 = scmp.ne.s32.totalorder %s50, %s51
      %p63 = scmp.eq.s32.totalorder %s20, 1
      %p64 = por %p62, %p63
      %p66 = scmp.ne.s32.totalorder %s51, %s65
      %p67 = scmp.eq.s32.totalorder %s20, 0
      %p68 = por %p66, %p67
      %s70 = sadd.s32 %s69, 1
      %p73 = scmp.eq.s32.totalorder %s14, 1
      %p74 = scmp.ne.s32.totalorder %s69, %s71
      %p75 = scmp.eq.s32.totalorder %s14, 0
      %p76 = por %p74, %p75
      %p77 = scmp.ne.s32.totalorder %s69, %s71
      %p78 = scmp.eq.s32.totalorder %s19, 1
      %p79 = por %p77, %p78
      %p80 = scmp.ne.s32.totalorder %s71, %s72
      %p81 = scmp.eq.s32.totalorder %s19, 0
      %p82 = por %p80, %p81
      %p83 = scmp.ne.s32.totalorder %s71, %s72
      %p84 = scmp.eq.s32.totalorder %s20, 1
      %p85 = por %p83, %p84
      %p87 = scmp.ne.s32.totalorder %s72, %s86
      %p88 = scmp.eq.s32.totalorder %s20, 0
      %p89 = por %p87, %p88
      %s91 = sadd.s32 %s90, 1
      %p94 = scmp.eq.s32.totalorder %s14, 1
      %p95 = scmp.ne.s32.totalorder %s90, %s92
      %p96 = scmp.eq.s32.totalorder %s14, 0
      %p97 = por %p95, %p96
      %p98 = scmp.ne.s32.totalorder %s90, %s92
      %p99 = scmp.eq.s32.totalorder %s19, 1
      %p100 = por %p98, %p99
      %p101 = scmp.ne.s32.totalorder %s92, %s93
      %p102 = scmp.eq.s32.totalorder %s19, 0
      %p103 = por %p101, %p102
      %p104 = scmp.ne.s32.totalorder %s92, %s93
      %p105 = scmp.eq.s32.totalorder %s20, 1
      %p106 = por %p104, %p105
      %p108 = scmp.ne.s32.totalorder %s93, %s107
      %p109 = scmp.eq.s32.totalorder %s20, 0
      %p110 = por %p108, %p109
      %s112 = sadd.s32 %s111, 1
      %p115 = scmp.eq.s32.totalorder %s14, 1
      %p116 = scmp.ne.s32.totalorder %s111, %s113
      %p117 = scmp.eq.s32.totalorder %s14, 0
      %p118 = por %p116, %p117
      %p119 = scmp.ne.s32.totalorder %s111, %s113
      %p120 = scmp.eq.s32.totalorder %s19, 1
      %p121 = por %p119, %p120
      %p122 = scmp.ne.s32.totalorder %s113, %s114
      %p123 = scmp.eq.s32.totalorder %s19, 0
      %p124 = por %p122, %p123
      %p125 = scmp.ne.s32.totalorder %s113, %s114
      %p126 = scmp.eq.s32.totalorder %s20, 1
      %p127 = por %p125, %p126
      %p129 = scmp.ne.s32.totalorder %s114, %s128
      %p130 = scmp.eq.s32.totalorder %s20, 0
      %p131 = por %p129, %p130
      %s132 = ssub.s32 %s14, %s21
      %p133 = scmp.eq.s32.totalorder %s132, 0
      %s135 = sadd.s32 %s134, 1
      %s136 = scalar_select %p133, %s134, %s135
      %p139 = pneg %p133
      %p140 = scmp.eq.s32.totalorder %s14, 1
      %p141 = por %p139, %p140
      %p142 = scmp.ne.s32.totalorder %s134, %s137
      %p143 = scmp.eq.s32.totalorder %s14, 0
      %p144 = por %p142, %p143
      %p145 = scmp.ne.s32.totalorder %s134, %s137
      %p146 = scmp.eq.s32.totalorder %s19, 1
      %p147 = por %p145, %p146
      %p148 = scmp.ne.s32.totalorder %s137, %s138
      %p149 = scmp.eq.s32.totalorder %s19, 0
      %p150 = por %p148, %p149
      %p151 = scmp.ne.s32.totalorder %s137, %s138
      %p152 = scmp.eq.s32.totalorder %s20, 1
      %p153 = por %p151, %p152
      %p155 = scmp.ne.s32.totalorder %s138, %s154
      %p156 = scmp.eq.s32.totalorder %s20, 0
      %p157 = por %p155, %p156
      %p158 = scmp.le.s32.totalorder 1, %s14
      %p159 = scmp.lt.s32.totalorder %s14, 3
      %p160 = pnand %p158, %p159
      %p161 = pneg %p160
      // Predicated region
      $region9: #{tpu_custom_call.1} parent=5 // pred_check
        _
      $region10: #{tpu_custom_call.1} parent=5 // pred_check_branch
        %163 = sbr.rel (%p160) target = $region12
      $region11: #{tpu_custom_call.1} parent=5 // pred_region
        %s164 = ssub.s32 %s14, 1
        // Predicated region
        $region13: #{tpu_custom_call.1} parent=11 // pred_check
          %p165 = pneg %p61
        $region14: #{tpu_custom_call.1} parent=11 // pred_check_branch
          %167 = sbr.rel (%p165) target = $region16
        $region15: #{tpu_custom_call.1} parent=11 // pred_region
          _
        $region16: #{tpu_custom_call.1} parent=11 // pred_fallthru
          _
        // Predicated region
        $region17: #{tpu_custom_call.1} parent=11 // pred_check
          %p168 = pneg %p82
        $region18: #{tpu_custom_call.1} parent=11 // pred_check_branch
          %170 = sbr.rel (%p168) target = $region20
        $region19: #{tpu_custom_call.1} parent=11 // pred_region
          _
        $region20: #{tpu_custom_call.1} parent=11 // pred_fallthru
          _
        // Predicated region
        $region21: #{tpu_custom_call.1} parent=11 // pred_check
          %p171 = pneg %p103
        $region22: #{tpu_custom_call.1} parent=11 // pred_check_branch
          %173 = sbr.rel (%p171) target = $region24
        $region23: #{tpu_custom_call.1} parent=11 // pred_region
          _
        $region24: #{tpu_custom_call.1} parent=11 // pred_fallthru
          _
        // Predicated region
        $region25: #{tpu_custom_call.1} parent=11 // pred_check
          %p174 = pneg %p124
        $region26: #{tpu_custom_call.1} parent=11 // pred_check_branch
          %176 = sbr.rel (%p174) target = $region28
        $region27: #{tpu_custom_call.1} parent=11 // pred_region
          _
        $region28: #{tpu_custom_call.1} parent=11 // pred_fallthru
          _
      $region12: #{tpu_custom_call.1} parent=5 // pred_fallthru
        _
      %p177 = scmp.lt.s32.totalorder %s14, 2
      // Predicated region
      $region29: #{tpu_custom_call.1} parent=5 // pred_check
        %p178 = pneg %p177
      $region30: #{tpu_custom_call.1} parent=5 // pred_check_branch
        %180 = sbr.rel (%p178) target = $region32
      $region31: #{tpu_custom_call.1} parent=5 // pred_region
        // Predicated region
        $region33: #{tpu_custom_call.1} parent=31 // pred_check
          %p181 = pneg %p34
        $region34: #{tpu_custom_call.1} parent=31 // pred_check_branch
          %183 = sbr.rel (%p181) target = $region36
        $region35: #{tpu_custom_call.1} parent=31 // pred_region
          %p184 = scmp.lt.s32.totalorder %s14, 1
          %s185 = scalar_select %p184, %s14, 1
          %s186 = smul.addr %s185, 8
          %s187 = scalar_lea.vmem %s0, %s186
        $region36: #{tpu_custom_call.1} parent=31 // pred_fallthru
          _
      $region32: #{tpu_custom_call.1} parent=5 // pred_fallthru
        _
      %p188 = scmp.le.s32.totalorder 1, %s14
      %p189 = scmp.lt.s32.totalorder %s14, 3
      %p190 = pnand %p188, %p189
      %p191 = pneg %p190
      // Predicated region
      $region37: #{tpu_custom_call.1} parent=5 // pred_check
        _
      $region38: #{tpu_custom_call.1} parent=5 // pred_check_branch
        %193 = sbr.rel (%p190) target = $region40
      $region39: #{tpu_custom_call.1} parent=5 // pred_region
        %s194 = ssub.s32 %s14, 1
        %p195 = scmp.lt.s32.totalorder %s19, 1
        %s196 = scalar_select %p195, %s19, 1
        %s197 = smul.addr %s196, 8
        %s198 = scalar_lea.vmem %s0, %s197
        %p199 = pneg %p40
        %p200 = pneg %p37
        %p201 = pneg %p61
        %p202 = pneg %p58
        %p203 = pneg %p82
        %p204 = pneg %p79
        %p205 = pneg %p103
        %p206 = pneg %p100
        %p207 = pneg %p124
        %p208 = pneg %p121
        %p209 = pneg %p150
        %p210 = pneg %p147
        %s211 = sand.u32 %s137, 1
        %s212 = scalar_lea.sflag [#allocation3], %s211
        %s213 = sand.u32 %s137, 1
        %s214 = smul.addr %s213, 8
        %s215 = scalar_lea.vmem [#allocation2], %s214
        %p216 = scmp.lt.s32.totalorder %s19, 1
        %s217 = scalar_select %p216, %s19, 1
        %s218 = smul.addr %s217, 8
        %s219 = scalar_lea.vmem %s0, %s218
        %v220 = vld [vmem:[%s219] sm:$0xff]
        %v221 = vld [vmem:[%s1] sm:$0xff]
        %v222 = vld [vmem:[%s1 + $0x8] sm:$0xff]
        %v223 = vld [vmem:[%s1 + $0x10] sm:$0xff]
        %v224 = vld [vmem:[%s1 + $0x18] sm:$0xff]
        %v225 = vld [vmem:[%s2] sm:$0x1]
        %v227 = vperm.slane %v225, 0
        %vm229 = vcmask 261120
        %v231 = vsel %vm229, %v220, 0
        %233 = vmatpush.msra.mxu0 0.0
        %234 = vmatpush.msra.mxu0 0.0
        %235 = vmatpush.msra.mxu0 0.0
        %236 = vmatpush.msra.mxu0 0.0
        %237 = vmatpush.msra.mxu0 0.0
        %238 = vmatpush.msra.mxu0 0.0
        %239 = vmatpush.msra.mxu0 0.0
        %240 = vmatpush.msra.mxu0 0.0
        %241 = vmatpush.msra.mxu0 0.0
        %242 = vmatpush.msra.mxu0 0.0
        %243 = vmatpush.msra.mxu0 0.0
        %244 = vmatpush.msra.mxu0 0.0
        %245 = vmatpush.msra.mxu0 %v224
        %246 = vmatpush.msra.mxu0 %v223
        %247 = vmatpush.msra.mxu0 %v222
        %248 = vmatpush.msra.mxu0 %v221
        %249 = vmatmul.f32.gmra.mxu0 %v231
        %v250 = vpop.f32.mrf.mxu0
        %v251 = vadd.f32 %v227, %v250
        %252 = vdwg.mxu0
        %v253 = vmax.f32 %v251, 0.0
        %v254 = vld [vmem:[%s3] sm:$0xff]
        %v255 = vld [vmem:[%s3 + $0x8] sm:$0xff]
        %v256 = vld [vmem:[%s3 + $0x10] sm:$0xff]
        %v257 = vld [vmem:[%s3 + $0x18] sm:$0xff]
        %v258 = vld [vmem:[%s4] sm:$0x1]
        %v260 = vperm.slane %v258, 0
        %v263 = vsel %vm229, %v253, 0
        %265 = vmatpush.msra.mxu0 0.0
        %266 = vmatpush.msra.mxu0 0.0
        %267 = vmatpush.msra.mxu0 0.0
        %268 = vmatpush.msra.mxu0 0.0
        %269 = vmatpush.msra.mxu0 0.0
        %270 = vmatpush.msra.mxu0 0.0
        %271 = vmatpush.msra.mxu0 0.0
        %272 = vmatpush.msra.mxu0 0.0
        %273 = vmatpush.msra.mxu0 0.0
        %274 = vmatpush.msra.mxu0 0.0
        %275 = vmatpush.msra.mxu0 0.0
        %276 = vmatpush.msra.mxu0 0.0
        %277 = vmatpush.msra.mxu0 %v257
        %278 = vmatpush.msra.mxu0 %v256
        %279 = vmatpush.msra.mxu0 %v255
        %280 = vmatpush.msra.mxu0 %v254
        %281 = vmatmul.f32.gmra.mxu0 %v263
        %v282 = vpop.f32.mrf.mxu0
        %v283 = vadd.f32 %v260, %v282
        %284 = vdwg.mxu0
        %vm285 = vcmask 130048
        %286 = vst.msk [vmem:[%s215] sm:$0xff] %vm285, %v283
        %s287 = sand.u32 %s137, 1
        %s288 = scalar_lea.sflag [#allocation3], %s287
        %s289 = sand.u32 %s137, 1
        %s290 = smul.addr %s289, 8
        %s291 = scalar_lea.vmem [#allocation2], %s290
        // Predicated region
        $region41: #{tpu_custom_call.1} parent=39 // pred_check
          %p292 = pneg %p147
        $region42: #{tpu_custom_call.1} parent=39 // pred_check_branch
          %294 = sbr.rel (%p292) target = $region44
        $region43: #{tpu_custom_call.1} parent=39 // pred_region
          %296 = vsyncadd %s288, 0
          %s297 = smul.addr %s19, 8
          %s298 = scalar_lea.hbm %s5, %s297
          %s300 = sshll.u32 %s291, 4
          %s301 = int_to_ptr.vmem [resolvable:$true] %s300
          %s302 = sshll.u32 %s298, 4
          %s303 = int_to_ptr.hbm [resolvable:$true] %s302
          %305 = dma.vmem_to_hbm [thread:$0]  %s301, 128, %s303, %s288
        $region44: #{tpu_custom_call.1} parent=39 // pred_fallthru
          _
      $region40: #{tpu_custom_call.1} parent=5 // pred_fallthru
        _
      %p306 = scmp.le.s32.totalorder 2, %s14
      // Predicated region
      $region45: #{tpu_custom_call.1} parent=5 // pred_check
        %p307 = pneg %p306
      $region46: #{tpu_custom_call.1} parent=5 // pred_check_branch
        %309 = sbr.rel (%p307) target = $region48
      $region47: #{tpu_custom_call.1} parent=5 // pred_region
        %s310 = ssub.s32 %s14, 2
        // Predicated region
        $region49: #{tpu_custom_call.1} parent=47 // pred_check
          %p311 = pneg %p153
        $region50: #{tpu_custom_call.1} parent=47 // pred_check_branch
          %313 = sbr.rel (%p311) target = $region52
        $region51: #{tpu_custom_call.1} parent=47 // pred_region
          %s314 = sand.u32 %s138, 1
          %s315 = scalar_lea.sflag [#allocation3], %s314
          %s316 = sand.u32 %s138, 1
          %s317 = smul.addr %s316, 8
          %s318 = scalar_lea.vmem [#allocation2], %s317
          %320 = dma.done %s315, 128
        $region52: #{tpu_custom_call.1} parent=47 // pred_fallthru
          _
      $region48: #{tpu_custom_call.1} parent=5 // pred_fallthru
        _
    $region6: #{tpu_custom_call.1} parent=1 // loop_footer
      %s18 = sadd.s32 1, %s14
    $region7: #{tpu_custom_call.1} parent=1 // loop_footer_branch
      %13 = sbr.rel target = $region3
    $region8: #{tpu_custom_call.1} parent=1 // loop_exit
      _
    %321 = vsyncpa [#allocation3], 1
    %s322 = scalar_lea.sflag [#allocation3], 1
    %323 = vsyncpa %s322, 1

</llo_original>
